<compile_context>
chip_gen: v6e
topology: v6e:2x2x1
jax: 0.10.0
libtpu: 0.0.40
codegen_flags: <defaults>
</compile_context>

<pallas_src>
import functools

import numpy as np
import jax
import jax.numpy as jnp
from jax import lax
from jax.experimental import pallas as pl
from jax.experimental.pallas import tpu as pltpu


def _total_loss_kernel(x_ref, mut_ref, mun_ref, y_ref, out_ref, *,
                       alpha, n_total, tile_n):
    i = pl.program_id(0)

    x = x_ref[...]                                   # (TILE, D) native dtype

    # x @ mu^T on the MXU; mu already transposed to (D, C) in the wrapper,
    # so the RHS is (K, N) and no in-kernel transpose is needed.
    xmu = jnp.dot(x, mut_ref[...],
                  preferred_element_type=jnp.float32)          # (TILE, C)

    x32 = x.astype(jnp.float32)
    xn = jnp.sum(x32 * x32, axis=-1, keepdims=True)            # (TILE, 1)

    # ||x - mu||^2 via the matmul identity; ||mu||^2 is precomputed in the
    # wrapper (mun_ref, (1, C) f32).  Clamp against FP cancellation.
    d2 = jnp.maximum(xn + mun_ref[...] - 2.0 * xmu, 0.0)       # (TILE, C)
    dist = jnp.sqrt(d2 * 0.5)                                  # (TILE, C)

    # one-hot labels via iota compare (no eye() table needed).
    y = y_ref[...]                                             # (TILE, 1) int32
    cls_ids = lax.broadcasted_iota(jnp.int32, dist.shape, 1)   # (TILE, C)
    onehot = (cls_ids == y).astype(jnp.float32)

    # adjust = dist + onehot*alpha*dist == dist * (1 + alpha*onehot)
    logits = -(dist * (1.0 + alpha * onehot))
    # picked logit = logits[n, y_n] = -(1 + alpha) * dist[n, y_n]
    picked = -(1.0 + alpha) * jnp.sum(dist * onehot, axis=-1, keepdims=True)

    # cross_entropy(logits, y) per row = logsumexp(logits) - logits[y]
    m = jnp.max(logits, axis=-1, keepdims=True)
    lse = m + jnp.log(jnp.sum(jnp.exp(logits - m), axis=-1, keepdims=True))

    # mask rows past the true N (the last tile may be partial / padded).
    row_ids = lax.broadcasted_iota(jnp.int32, lse.shape, 0) + i * tile_n
    per_row = jnp.where(row_ids < n_total, lse - picked, 0.0)  # (TILE, 1)

    # per-tile partial sum, splatted across an aligned (1, 8, 128) block.
    partial = jnp.sum(per_row, keepdims=True)                  # (1, 1) f32
    out_ref[...] = jnp.broadcast_to(partial.reshape(1, 1, 1), out_ref.shape)


def _pick_tile(n, d, itemsize):
    # Per-row VMEM cost: double-buffered x block, in-kernel f32 copy of x,
    # double-buffered lane-padded (tile,1) int32 label block, ~6 live
    # lane-padded (tile, C<=128) f32 temporaries.
    per_row = 2 * d * itemsize + 4 * d + 2 * 128 * 4 + 6 * 128 * 4
    tile = int((20 << 20) // per_row)                 # ~20 MiB working set
    # keep the streamed x block itself around the 1-4 MiB sweet spot
    tile = min(tile, max(512, (4 << 20) // max(1, d * itemsize)))
    tile = max(tile, 512)
    return tile


def total_loss(group_x, group_y, mu, alpha=0.5, *, tile_rows=None,
               cast_x_to_bf16=False):
    """Pallas equivalent of TotalLossFunc.forward(group_x, group_y, mu, alpha).

    Class count is taken from mu.shape[0] (static); the torch module derives
    it data-dependently as group_y.max()+1 — the caller must keep them equal.
    """
    n, d = group_x.shape
    c = mu.shape[0]

    # Optional: halve the bytes of the dominant HBM stream (precision caveat:
    # small distances become noisier; accumulation stays f32 either way).
    x = group_x.astype(jnp.bfloat16) if cast_x_to_bf16 else group_x
    itemsize = jnp.dtype(x.dtype).itemsize

    # --- tile sizing: by bytes, VMEM-aware -----------------------------------
    tile = _pick_tile(n, d, itemsize) if tile_rows is None else int(tile_rows)
    if n <= tile:
        tile = n                              # single full-extent block (always legal)
    else:
        tile = max(8, tile - tile % 8)        # sublane-aligned stream tiles
    num_tiles = pl.cdiv(n, tile)

    # --- explicit scoped-VMEM limit (v5e default 16 MiB; v7x physical 64 MiB) --
    mu_itemsize = jnp.dtype(mu.dtype).itemsize
    vmem_need = (2 * tile * d * itemsize              # x, double-buffered
                 + tile * d * 4                       # f32 copy of x in-kernel
                 + 2 * tile * 128 * 4                 # (tile,1) labels, lane-padded, x2
                 + 6 * tile * 128 * 4                 # (tile,C)/(tile,1) f32 temps
                 + 2 * (d * c * mu_itemsize + 128 * 4 + 8 * 128 * 4))  # mu_t, mun, out
    vmem_limit = int(min(max(vmem_need + (4 << 20), 16 << 20), 48 << 20))

    # --- hoist mu-dependent constants out of the grid loop --------------------
    mu_t = jnp.transpose(mu).astype(x.dtype)                       # (D, C)
    mu32 = mu.astype(jnp.float32)
    mun = jnp.transpose(jnp.sum(mu32 * mu32, axis=-1, keepdims=True))  # (1, C) f32

    y2d = group_y.astype(jnp.int32).reshape(n, 1)

    partials = pl.pallas_call(
        functools.partial(_total_loss_kernel, alpha=float(alpha),
                          n_total=int(n), tile_n=int(tile)),
        out_shape=jax.ShapeDtypeStruct((num_tiles, 8, 128), jnp.float32),
        grid_spec=pltpu.PrefetchScalarGridSpec(
            num_scalar_prefetch=0,
            grid=(num_tiles,),
            in_specs=[
                pl.BlockSpec((tile, d), lambda i: (i, 0)),   # x tile (pipelined stream)
                pl.BlockSpec((d, c), lambda i: (0, 0)),      # mu^T: resident
                pl.BlockSpec((1, c), lambda i: (0, 0)),      # ||mu||^2: resident
                pl.BlockSpec((tile, 1), lambda i: (i, 0)),   # labels tile
            ],
            # per-tile partial sums in aligned (8,128) slabs -> no masked stores
            out_specs=pl.BlockSpec((1, 8, 128), lambda i: (i, 0, 0)),
        ),
        compiler_params=pltpu.CompilerParams(
            dimension_semantics=("parallel",),   # independent tiles (v7x: both TCs)
            vmem_limit_bytes=vmem_limit,
        ),
    )(x, mu_t, mun, y2d)

    # finalize in the wrapper: sum of per-tile partials, then mean over N.
    return jnp.sum(partials[:, 0, 0]) / jnp.float32(n)


def ref_loss(group_x, group_y, mu, alpha=0.5):
    """Pure-JAX reference mirroring the torch module exactly."""
    diff = group_x[None, :, :] - mu[:, None, :]            # (C, N, D)
    d2 = jnp.einsum("cnd,cnd->cn", diff, diff)             # diag of matmul
    dist = jnp.sqrt(d2 / 2.0).T                            # (N, C)
    onehot = jax.nn.one_hot(group_y, mu.shape[0], dtype=dist.dtype)
    adjust = dist + onehot * alpha * dist
    logits = -adjust
    lse = jax.nn.logsumexp(logits, axis=-1)
    picked = jnp.take_along_axis(logits, group_y[:, None], axis=-1)[:, 0]
    return jnp.mean(lse - picked)


if __name__ == "__main__":
    key = jax.random.PRNGKey(0)

    # --- small single-tile case -----------------------------------------------
    N, D, C = 8, 32, 4   # samples, feature dim, num classes
    kx, kmu, ky, k2x, k2mu, k2y = jax.random.split(key, 6)
    group_x = jax.random.normal(kx, (N, D), dtype=jnp.float32)
    mu = jax.random.normal(kmu, (C, D), dtype=jnp.float32)       # class means
    # ensure every class appears so num_classes = group_y.max()+1 == C,
    # matching the data-dependent class count in the torch forward.
    group_y = jnp.concatenate(
        [jnp.arange(C, dtype=jnp.int32),
         jax.random.randint(ky, (N - C,), 0, C, dtype=jnp.int32)]
    )
    assert int(group_y.max()) + 1 == C == mu.shape[0]

    loss = jax.block_until_ready(total_loss(group_x, group_y, mu, alpha=0.5))
    ref = jax.block_until_ready(ref_loss(group_x, group_y, mu, 0.5))
    assert np.allclose(np.asarray(loss), np.asarray(ref), rtol=1e-4, atol=1e-4), (loss, ref)

    # --- multi-tile case (exercises grid + masked partial last tile) ----------
    N2, D2, C2 = 300, 64, 4
    x2 = jax.random.normal(k2x, (N2, D2), dtype=jnp.float32)
    mu2 = jax.random.normal(k2mu, (C2, D2), dtype=jnp.float32)
    y2 = jnp.concatenate(
        [jnp.arange(C2, dtype=jnp.int32),
         jax.random.randint(k2y, (N2 - C2,), 0, C2, dtype=jnp.int32)]
    )
    assert int(y2.max()) + 1 == C2 == mu2.shape[0]

    loss2 = jax.block_until_ready(total_loss(x2, y2, mu2, alpha=0.5, tile_rows=128))
    ref2 = jax.block_until_ready(ref_loss(x2, y2, mu2, 0.5))
    assert np.allclose(np.asarray(loss2), np.asarray(ref2), rtol=1e-4, atol=1e-4), (loss2, ref2)

    print("KERNEL_OK")
</pallas_src>

<mosaic_0001>
module attributes {stable_mosaic.version = 11 : i64} {
  func.func @_total_loss_kernel(%arg0: i32, %arg1: memref<8x32xf32, #tpu.memory_space<vmem>>, %arg2: memref<32x4xf32, #tpu.memory_space<vmem>>, %arg3: memref<1x4xf32, #tpu.memory_space<vmem>>, %arg4: memref<8x1xi32, #tpu.memory_space<vmem>>, %arg5: memref<1x8x128xf32, #tpu.memory_space<vmem>>) attributes {dimension_semantics = [#tpu.dimension_semantics<parallel>], iteration_bounds = array<i64: 1>, scalar_prefetch = 0 : i64, scratch_operands = 0 : i64, tpu.core_type = #tpu.core_type<tc>, window_params = [{transform_indices = @transform_0, window_bounds = array<i64: 8, 32>}, {pipeline_mode = #tpu.pipeline_mode<synchronous>, transform_indices = @transform_1, window_bounds = array<i64: 32, 4>}, {pipeline_mode = #tpu.pipeline_mode<synchronous>, transform_indices = @transform_2, window_bounds = array<i64: 1, 4>}, {transform_indices = @transform_3, window_bounds = array<i64: 8, 1>}, {transform_indices = @transform_4, window_bounds = array<i64: 1, 8, 128>}]} {
    %c0 = arith.constant 0 : index
    %c0_0 = arith.constant 0 : index
    %0 = vector.load %arg1[%c0, %c0_0] : memref<8x32xf32, #tpu.memory_space<vmem>>, vector<8x32xf32>
    %c0_1 = arith.constant 0 : index
    %c0_2 = arith.constant 0 : index
    %1 = vector.load %arg2[%c0_1, %c0_2] : memref<32x4xf32, #tpu.memory_space<vmem>>, vector<32x4xf32>
    %cst = arith.constant dense<0.000000e+00> : vector<8x4xf32>
    %2 = tpu.matmul %0, %1, %cst {dimension_numbers = #tpu.dot_dimension_numbers<[1], [0], [0], [1], [0, 0, 1, 1], [], []>} : vector<8x32xf32>, vector<32x4xf32>, vector<8x4xf32> -> vector<8x4xf32>
    %3 = arith.mulf %0, %0 : vector<8x32xf32>
    %cst_3 = arith.constant dense<0.000000e+00> : vector<8xf32>
    %4 = vector.multi_reduction <add>, %3, %cst_3 [1] : vector<8x32xf32> to vector<8xf32>
    %5 = vector.shape_cast %4 : vector<8xf32> to vector<8x1xf32>
    %c0_4 = arith.constant 0 : index
    %c0_5 = arith.constant 0 : index
    %6 = vector.load %arg3[%c0_4, %c0_5] : memref<1x4xf32, #tpu.memory_space<vmem>>, vector<1x4xf32>
    %7 = vector.broadcast %5 : vector<8x1xf32> to vector<8x4xf32>
    %8 = vector.broadcast %6 : vector<1x4xf32> to vector<8x4xf32>
    %9 = arith.addf %7, %8 : vector<8x4xf32>
    %cst_6 = arith.constant 2.000000e+00 : f32
    %10 = vector.broadcast %cst_6 : f32 to vector<8x4xf32>
    %11 = arith.mulf %10, %2 : vector<8x4xf32>
    %12 = arith.subf %9, %11 : vector<8x4xf32>
    %cst_7 = arith.constant 0.000000e+00 : f32
    %13 = vector.broadcast %cst_7 : f32 to vector<8x4xf32>
    %14 = arith.maximumf %12, %13 : vector<8x4xf32>
    %cst_8 = arith.constant 5.000000e-01 : f32
    %15 = vector.broadcast %cst_8 : f32 to vector<8x4xf32>
    %16 = arith.mulf %14, %15 : vector<8x4xf32>
    %17 = math.sqrt %16 : vector<8x4xf32>
    %c0_9 = arith.constant 0 : index
    %c0_10 = arith.constant 0 : index
    %18 = vector.load %arg4[%c0_9, %c0_10] : memref<8x1xi32, #tpu.memory_space<vmem>>, vector<8x1xi32>
    %19 = tpu.iota {dimensions = array<i32: 1>} : vector<8x4xi32>
    %20 = vector.broadcast %18 : vector<8x1xi32> to vector<8x4xi32>
    %21 = arith.cmpi eq, %19, %20 : vector<8x4xi32>
    %22 = arith.extui %21 : vector<8x4xi1> to vector<8x4xi32>
    %23 = arith.sitofp %22 : vector<8x4xi32> to vector<8x4xf32>
    %cst_11 = arith.constant 5.000000e-01 : f32
    %24 = vector.broadcast %cst_11 : f32 to vector<8x4xf32>
    %25 = arith.mulf %24, %23 : vector<8x4xf32>
    %cst_12 = arith.constant 1.000000e+00 : f32
    %26 = vector.broadcast %cst_12 : f32 to vector<8x4xf32>
    %27 = arith.addf %26, %25 : vector<8x4xf32>
    %28 = arith.mulf %17, %27 : vector<8x4xf32>
    %cst_13 = arith.constant 0.000000e+00 : f32
    %29 = vector.broadcast %cst_13 : f32 to vector<8x4xf32>
    %30 = arith.subf %29, %28 : vector<8x4xf32>
    %31 = arith.mulf %17, %23 : vector<8x4xf32>
    %cst_14 = arith.constant dense<0.000000e+00> : vector<8xf32>
    %32 = vector.multi_reduction <add>, %31, %cst_14 [1] : vector<8x4xf32> to vector<8xf32>
    %33 = vector.shape_cast %32 : vector<8xf32> to vector<8x1xf32>
    %cst_15 = arith.constant -1.500000e+00 : f32
    %34 = vector.broadcast %cst_15 : f32 to vector<8x1xf32>
    %35 = arith.mulf %34, %33 : vector<8x1xf32>
    %cst_16 = arith.constant dense<0xFF800000> : vector<8xf32>
    %36 = vector.multi_reduction <maximumf>, %30, %cst_16 [1] : vector<8x4xf32> to vector<8xf32>
    %37 = vector.shape_cast %36 : vector<8xf32> to vector<8x1xf32>
    %38 = vector.broadcast %37 : vector<8x1xf32> to vector<8x4xf32>
    %39 = arith.subf %30, %38 : vector<8x4xf32>
    %40 = math.exp %39 : vector<8x4xf32>
    %cst_17 = arith.constant dense<0.000000e+00> : vector<8xf32>
    %41 = vector.multi_reduction <add>, %40, %cst_17 [1] : vector<8x4xf32> to vector<8xf32>
    %42 = vector.shape_cast %41 : vector<8xf32> to vector<8x1xf32>
    %43 = math.log %42 : vector<8x1xf32>
    %44 = arith.addf %37, %43 : vector<8x1xf32>
    %45 = tpu.iota {dimensions = array<i32: 0>} : vector<8x1xi32>
    %c8_i32 = arith.constant 8 : i32
    %46 = arith.muli %arg0, %c8_i32 : i32
    %47 = vector.broadcast %46 : i32 to vector<8x1xi32>
    %48 = arith.addi %45, %47 : vector<8x1xi32>
    %c8_i32_18 = arith.constant 8 : i32
    %49 = vector.broadcast %c8_i32_18 : i32 to vector<8x1xi32>
    %50 = arith.cmpi slt, %48, %49 : vector<8x1xi32>
    %51 = arith.subf %44, %35 : vector<8x1xf32>
    %cst_19 = arith.constant 0.000000e+00 : f32
    %52 = vector.broadcast %cst_19 : f32 to vector<8x1xf32>
    %53 = arith.select %50, %51, %52 : vector<8x1xi1>, vector<8x1xf32>
    %54 = vector.shape_cast %53 : vector<8x1xf32> to vector<1x8x1xf32>
    %cst_20 = arith.constant dense<0.000000e+00> : vector<1xf32>
    %55 = vector.multi_reduction <add>, %54, %cst_20 [1, 2] : vector<1x8x1xf32> to vector<1xf32>
    %56 = vector.shape_cast %55 : vector<1xf32> to vector<1x1x1xf32>
    %57 = vector.extract %56[0, 0, 0] : f32 from vector<1x1x1xf32>
    %58 = vector.broadcast %57 : f32 to vector<1x1xf32>
    %59 = vector.shape_cast %58 : vector<1x1xf32> to vector<1x1x1xf32>
    %60 = vector.shape_cast %59 : vector<1x1x1xf32> to vector<1x1x1xf32>
    %61 = vector.broadcast %60 : vector<1x1x1xf32> to vector<1x8x128xf32>
    %c0_21 = arith.constant 0 : index
    %c0_22 = arith.constant 0 : index
    %c0_23 = arith.constant 0 : index
    %62 = vector.load %arg5[%c0_21, %c0_22, %c0_23] : memref<1x8x128xf32, #tpu.memory_space<vmem>>, vector<1x8x128xf32>
    tpu.vector_store %arg5[%c0_21, %c0_22, %c0_23], %61 {strides = array<i32>} : memref<1x8x128xf32, #tpu.memory_space<vmem>>, vector<1x8x128xf32>,
    return
  }
  func.func @transform_0(%arg0: i32) -> (i32, i32) {
    %c0_i32 = arith.constant 0 : i32
    %c0_i32_0 = arith.constant 0 : i32
    return %arg0, %c0_i32 : i32, i32
  }
  func.func @transform_1(%arg0: i32) -> (i32, i32) {
    %c0_i32 = arith.constant 0 : i32
    %c0_i32_0 = arith.constant 0 : i32
    %c0_i32_1 = arith.constant 0 : i32
    return %c0_i32, %c0_i32_0 : i32, i32
  }
  func.func @transform_2(%arg0: i32) -> (i32, i32) {
    %c0_i32 = arith.constant 0 : i32
    %c0_i32_0 = arith.constant 0 : i32
    %c0_i32_1 = arith.constant 0 : i32
    return %c0_i32, %c0_i32_0 : i32, i32
  }
  func.func @transform_3(%arg0: i32) -> (i32, i32) {
    %c0_i32 = arith.constant 0 : i32
    %c0_i32_0 = arith.constant 0 : i32
    return %arg0, %c0_i32 : i32, i32
  }
  func.func @transform_4(%arg0: i32) -> (i32, i32, i32) {
    %c0_i32 = arith.constant 0 : i32
    %c0_i32_0 = arith.constant 0 : i32
    %c0_i32_1 = arith.constant 0 : i32
    return %arg0, %c0_i32, %c0_i32_0 : i32, i32, i32
  }
}

</mosaic_0001>

<llo_original>
// kernel: tpu_custom_call.1
$region0: #{tpu_custom_call.1}
  #allocation0 [shape = 'u32[]', space=smem, size = 0x4, offset = 0x4, fixed_abs, tag = 'smem constant byte address 0x4 - core index']
  #allocation1 [shape = 'u32[144,128]{1,0:T(1,128)}', space=vmem, size = 0x12000, scoped, tag = 'internal scratch']
  %s0 = inlined_call_operand.vmem [shape: f32[8,32], index: 0, kind: input, shape index: {}]
  %s1 = inlined_call_operand.vmem [shape: f32[32,4], index: 1, kind: input, shape index: {}]
  %s2 = inlined_call_operand.vmem [shape: f32[1,4], index: 2, kind: input, shape index: {}]
  %s3 = inlined_call_operand.vmem [shape: s32[8,1], index: 3, kind: input, shape index: {}]
  %s4 = inlined_call_operand.hbm [shape: f32[1,8,128], index: 4, kind: output, shape index: {}]
  %s5 = sld [smem:[#allocation0]]
  $region26: #{tpu_custom_call.1} parent=0
    _
  %s7 = ssub.s32 1, %s5
  %s8 = scalar_select 0, %s7, %s5
  $region1: #{tpu_custom_call.1} parent=0
    #allocation2 [shape = 'u8[4096]{0}', space=vmem, size = 0x1000, scoped, tag = 'output window, operand 0, single buffered']
    #allocation3 [shape = 's32[1]{0}', space=sflag, size = 0x4, scoped, tag = 'scoped memory for tpu_custom_call.1']
    %9 = vsyncpa [#allocation3], 0
    // Predicated region
    $region2: #{tpu_custom_call.1} parent=1 // pred_check
      _
    $region3: #{tpu_custom_call.1} parent=1 // pred_check_branch
      %11 = sbr.rel (0) target = $region5
    $region4: #{tpu_custom_call.1} parent=1 // pred_region
      _
    $region5: #{tpu_custom_call.1} parent=1 // pred_fallthru
      _
    // Predicated region
    $region6: #{tpu_custom_call.1} parent=1 // pred_check
      _
    $region7: #{tpu_custom_call.1} parent=1 // pred_check_branch
      %13 = sbr.rel (0) target = $region9
    $region8: #{tpu_custom_call.1} parent=1 // pred_region
      _
    $region9: #{tpu_custom_call.1} parent=1 // pred_fallthru
      _
    // Predicated region
    $region10: #{tpu_custom_call.1} parent=1 // pred_check
      _
    $region11: #{tpu_custom_call.1} parent=1 // pred_check_branch
      %15 = sbr.rel (0) target = $region13
    $region12: #{tpu_custom_call.1} parent=1 // pred_region
      _
    $region13: #{tpu_custom_call.1} parent=1 // pred_fallthru
      _
    // Predicated region
    $region14: #{tpu_custom_call.1} parent=1 // pred_check
      _
    $region15: #{tpu_custom_call.1} parent=1 // pred_check_branch
      %17 = sbr.rel (0) target = $region17
    $region16: #{tpu_custom_call.1} parent=1 // pred_region
      _
    $region17: #{tpu_custom_call.1} parent=1 // pred_fallthru
      _
    %v18 = vld [vmem:[%s0] sm:$0xff]
    %v19 = vld [vmem:[%s1] sm:$0xff]
    %v20 = vld [vmem:[%s1 + $0x8] sm:$0xff]
    %v21 = vld [vmem:[%s1 + $0x10] sm:$0xff]
    %v22 = vld [vmem:[%s1 + $0x18] sm:$0xff]
    %vm23 = vcmask 261120
    %v25 = vsel %vm23, %v18, 0
    %27 = vmatprep.subr.mxu0 0.0
    %28 = vmatpush1.msra.mxu0 0.0
    %29 = vmatprep.subr.mxu0 0.0
    %30 = vmatpush1.msra.mxu0 0.0
    %31 = vmatprep.subr.mxu0 0.0
    %32 = vmatpush1.msra.mxu0 0.0
    %33 = vmatprep.subr.mxu0 0.0
    %34 = vmatpush1.msra.mxu0 0.0
    %35 = vmatprep.subr.mxu0 0.0
    %36 = vmatpush1.msra.mxu0 0.0
    %37 = vmatprep.subr.mxu0 0.0
    %38 = vmatpush1.msra.mxu0 0.0
    %39 = vmatprep.subr.mxu0 0.0
    %40 = vmatpush1.msra.mxu0 0.0
    %41 = vmatprep.subr.mxu0 0.0
    %42 = vmatpush1.msra.mxu0 0.0
    %43 = vmatprep.subr.mxu0 0.0
    %44 = vmatpush1.msra.mxu0 0.0
    %45 = vmatprep.subr.mxu0 0.0
    %46 = vmatpush1.msra.mxu0 0.0
    %47 = vmatprep.subr.mxu0 0.0
    %48 = vmatpush1.msra.mxu0 0.0
    %49 = vmatprep.subr.mxu0 0.0
    %50 = vmatpush1.msra.mxu0 0.0
    %51 = vmatprep.subr.mxu0 0.0
    %52 = vmatpush1.msra.mxu0 %v22
    %53 = vmatprep.subr.mxu0 0.0
    %54 = vmatpush1.msra.mxu0 %v21
    %55 = vmatprep.subr.mxu0 0.0
    %56 = vmatpush1.msra.mxu0 %v20
    %57 = vmatprep.subr.mxu0 0.0
    %58 = vmatpush1.msra.mxu0 %v19
    %59 = vmatprep.subr.mxu0 0.0
    %60 = vmatpush2.msra.mxu0 0.0
    %61 = vmatprep.subr.mxu0 0.0
    %62 = vmatpush2.msra.mxu0 0.0
    %63 = vmatprep.subr.mxu0 0.0
    %64 = vmatpush2.msra.mxu0 0.0
    %65 = vmatprep.subr.mxu0 0.0
    %66 = vmatpush2.msra.mxu0 0.0
    %67 = vmatprep.subr.mxu0 0.0
    %68 = vmatpush2.msra.mxu0 0.0
    %69 = vmatprep.subr.mxu0 0.0
    %70 = vmatpush2.msra.mxu0 0.0
    %71 = vmatprep.subr.mxu0 0.0
    %72 = vmatpush2.msra.mxu0 0.0
    %73 = vmatprep.subr.mxu0 0.0
    %74 = vmatpush2.msra.mxu0 0.0
    %75 = vmatprep.subr.mxu0 0.0
    %76 = vmatpush2.msra.mxu0 0.0
    %77 = vmatprep.subr.mxu0 0.0
    %78 = vmatpush2.msra.mxu0 0.0
    %79 = vmatprep.subr.mxu0 0.0
    %80 = vmatpush2.msra.mxu0 0.0
    %81 = vmatprep.subr.mxu0 0.0
    %82 = vmatpush2.msra.mxu0 0.0
    %83 = vmatprep.subr.mxu0 0.0
    %84 = vmatpush2.msra.mxu0 0.0
    %85 = vmatprep.subr.mxu0 0.0
    %86 = vmatpush2.msra.mxu0 0.0
    %87 = vmatprep.subr.mxu0 0.0
    %88 = vmatpush2.msra.mxu0 0.0
    %89 = vmatprep.subr.mxu0 0.0
    %90 = vmatpush2.msra.mxu0 0.0
    %91 = vmatprep.mubr.f32.mxu0 0.0
    %92 = vmatmul.mubr.f32.gmra.mxu0 %v25
    %v93 = vpop.f32.mrf.mxu0
    %v94 = vadd.f32 0.0, %v93
    %v95 = vpop.f32.mrf.mxu0
    %96 = vdwg.mxu0
    %v97 = vmul.f32 %v18, %v18
    %v98 = vsel %vm23, %v97, 0.0
    %99 = vadd.xlane.f32.xlu0 %v98
    %v100 = vpop.xlane.xlu0 %99
    %v101 = vld [vmem:[%s2] sm:$0x1]
    %v103 = vlaneseq
    %v104 = vshrl.u32 %v103, 7
    %v105 = vsub.s32 0, %v104
    %v106 = vrot.slane %v101, %v105
    %v108 = vadd.f32 %v100, %v106
    %v109 = vmul.f32 %v94, 2.0
    %v110 = vsub.f32 %v108, %v109
    %v111 = vmax.f32 %v110, 0.0
    %v112 = vmul.f32 %v111, 0.5
    %v113 = vrsqrt.pop %v112
    %v114 = vmul.f32 %v112, %v113
    %vm115 = vcmp.eq.f32.partialorder %v112, inf
    %v116 = vsel %vm115, %v112, %v114
    %vm117 = vcmp.eq.f32.partialorder %v112, 0.0
    %v118 = vand.u32 %v112, 2147483648
    %v119 = vsel %vm117, %v118, %v116
    %v120 = vld [vmem:[%s3] sm:$0xff]
    %v121 = vlaneseq
    %v122 = vand.u32 %v121, 127
    %123 = vset.pattern.permute.xlu0 0
    %124 = vperm.xlu0 %123, %v120
    %v125 = vpop.permute.xlu0 %124
    %vm126 = vcmp.eq.s32.totalorder %v122, %v125
    %v127 = vsel %vm126, 1, 0
    %v128 = vcvt.s32.f32 %v127
    %v129 = vmul.f32 %v128, 0.5
    %v130 = vadd.f32 %v129, 1.0
    %v131 = vmul.f32 %v119, %v130
    %v132 = vsub.f32 0.0, %v131
    %v133 = vmul.f32 %v119, %v128
    %vm134 = vcmask 31744
    %v135 = vsel %vm134, %v133, 0.0
    %136 = vadd.xlane.f32.xlu0 %v135
    %v137 = vpop.xlane.xlu0 %136
    %v138 = vmul.f32 %v137, -1.5
    %v139 = vsel %vm134, %v132, -inf
    %140 = vmax.xlane.f32.xlu0 %v139
    %v141 = vpop.xlane.xlu0 %140
    %v142 = vsub.f32 %v132, %v141
    %v143 = vmul.f32 %v142, 1.442695
    %v144 = vpow.pop %v143
    %v145 = vsel %vm134, %v144, 0.0
    %146 = vadd.xlane.f32.xlu0 %v145
    %v147 = vpop.xlane.xlu0 %146
    %v148 = vlog2.pop %v147
    %v149 = vmul.f32 %v148, 0.6931472
    %v150 = vadd.f32 %v141, %v149
    %v151 = vlaneseq
    %v152 = vshrl.u32 %v151, 7
    %s153 = smul.u32 0, 8
    %v154 = vstv %s153
    %v155 = vadd.s32 %v152, %v154
    %vm156 = vcmp.lt.s32.totalorder %v155, 8
    %v157 = vsub.f32 %v150, %v138
    %v158 = vsel %vm156, %v157, 0.0
    %vm159 = vcmask 7168
    %v160 = vsel %vm159, %v158, 0.0
    %161 = vadd.xlane.f32.xlu0 %v160
    %v162 = vpop.xlane.xlu0 %161
    %v163 = vrot.slane %v162, 4
    %v164 = vadd.f32 %v162, %v163
    %v165 = vrot.slane %v164, 2
    %v166 = vadd.f32 %v164, %v165
    %v167 = vrot.slane %v166, 1
    %v168 = vadd.f32 %v166, %v167
    %s169 = vtos %v168
    %v170 = vstv %s169
    %171 = vst [vmem:[#allocation2] sm:$0xff] %v170
    // Predicated region
    $region18: #{tpu_custom_call.1} parent=1 // pred_check
      _
    $region19: #{tpu_custom_call.1} parent=1 // pred_check_branch
      %173 = sbr.rel (0) target = $region21
    $region20: #{tpu_custom_call.1} parent=1 // pred_region
      %s175 = ssub.s32 128, 128
      %176 = vsyncadd [#allocation3], %s175
      %s178 = sshll.u32 [#allocation2], 4
      %s179 = int_to_ptr.vmem [resolvable:$true] %s178
      %181 = dma.vmem_to_hbm [thread:$0]  %s179, 128, %s4, [#allocation3]
    $region21: #{tpu_custom_call.1} parent=1 // pred_fallthru
      _
    // Predicated region
    $region22: #{tpu_custom_call.1} parent=1 // pred_check
      _
    $region23: #{tpu_custom_call.1} parent=1 // pred_check_branch
      %183 = sbr.rel (0) target = $region25
    $region24: #{tpu_custom_call.1} parent=1 // pred_region
      %184 = dma.done [#allocation3], 128
    $region25: #{tpu_custom_call.1} parent=1 // pred_fallthru
      _
    %185 = vsyncpa [#allocation3], 1

</llo_original>
